<compile_context>
chip_gen: v5e
topology: v5e:2x2
jax: 0.10.0
libtpu: 0.0.40
codegen_flags: <defaults>
</compile_context>

<pallas_src>
import functools

import jax
import jax.numpy as jnp
import numpy as np
from jax.experimental import pallas as pl
from jax.experimental.pallas import tpu as pltpu


def _l2_normalize(x, eps=1e-12):
    # torch.nn.functional.normalize(x, dim=-1): x / max(||x||_2, eps)
    norm = jnp.sqrt(jnp.sum(x * x, axis=-1, keepdims=True))
    return x / jnp.maximum(norm, eps)


def _term_loss(pos, neg, psum, sel):
    """One compute_loss(...) term on fixed-shape data.

    pos/neg/psum/sel share one 2D shape ([Ba,1] or [1,Bc]); `sel` is the 0/1
    row-selection weight replacing the reference's dynamic boolean indexing.
    """
    ratio = (pos + 1e-8) / (pos + neg + 1e-8)
    per_row = jnp.log(ratio) / jnp.maximum(psum, 1e-30)
    per_row = jnp.where(sel > 0.0, per_row, 0.0)      # drop unselected anchors
    n_sel = jnp.sum(sel)
    loss = -(jnp.sum(per_row) / jnp.maximum(n_sel, 1.0))
    loss = jnp.where(n_sel > 0.0, loss, 0.0)          # empty mean -> nan -> 0 in ref
    finite = jnp.logical_and(loss == loss, jnp.abs(loss) < jnp.float32(3.0e38))
    return jnp.where(finite, loss, 0.0)               # ref: isinf/isnan -> 0
    # TODO(synk): the reference's runtime print-free isinf/isnan replacement is
    # reproduced numerically; no device-side logging is emitted.


def _scl_independent_kernel(f1_ref, f2_ref, mpc_ref, mps1_ref, mns1_ref,
                            mps2_ref, mns2_ref, selc1_ref, selc2_ref,
                            sels1_ref, sels2_ref, out_ref, *,
                            inv_temperature, sim_type):
    # Features arrive in their storage dtype (bf16 by default); compute in f32.
    f1 = f1_ref[...].astype(jnp.float32)              # [B1, D]
    f2 = f2_ref[...].astype(jnp.float32)              # [B2, D]
    if sim_type == 'cos':
        f1 = _l2_normalize(f1)
        f2 = _l2_normalize(f2)

    # Three MXU matmuls with f32 accumulation.  exp(sim/T) of the cross term is
    # computed once and reused for loss1 (rows) and loss2 (columns).
    e12 = jnp.exp(jax.lax.dot_general(
        f1, f2, (((1,), (1,)), ((), ())),
        preferred_element_type=jnp.float32) * inv_temperature)   # [B1, B2]
    e11 = jnp.exp(jax.lax.dot_general(
        f1, f1, (((1,), (1,)), ((), ())),
        preferred_element_type=jnp.float32) * inv_temperature)   # [B1, B1]
    e22 = jnp.exp(jax.lax.dot_general(
        f2, f2, (((1,), (1,)), ((), ())),
        preferred_element_type=jnp.float32) * inv_temperature)   # [B2, B2]

    mpc = mpc_ref[...]        # cross positives (logits_mask == ones in 'cross')
    mps1 = mps1_ref[...]      # self positives, diagonal already zeroed
    mns1 = mns1_ref[...]      # self negatives, diagonal already zeroed
    mps2 = mps2_ref[...]
    mns2 = mns2_ref[...]

    # loss1: anchors = rows of f1, mask = mask_cross; negatives = 1 - mask.
    pos1 = jnp.sum(e12 * mpc, axis=1, keepdims=True)
    tot1 = jnp.sum(e12, axis=1, keepdims=True)
    psum1 = jnp.sum(mpc, axis=1, keepdims=True)
    l1 = _term_loss(pos1, tot1 - pos1, psum1, selc1_ref[...])

    # loss2: anchors = rows of f2, mask = mask_cross.T -> column reductions of e12.
    pos2 = jnp.sum(e12 * mpc, axis=0, keepdims=True)
    tot2 = jnp.sum(e12, axis=0, keepdims=True)
    psum2 = jnp.sum(mpc, axis=0, keepdims=True)
    l2 = _term_loss(pos2, tot2 - pos2, psum2, selc2_ref[...])

    # loss3 / loss4: self-contrast terms (diagonal excluded by the masks).
    pos3 = jnp.sum(e11 * mps1, axis=1, keepdims=True)
    neg3 = jnp.sum(e11 * mns1, axis=1, keepdims=True)
    psum3 = jnp.sum(mps1, axis=1, keepdims=True)
    l3 = _term_loss(pos3, neg3, psum3, sels1_ref[...])

    pos4 = jnp.sum(e22 * mps2, axis=1, keepdims=True)
    neg4 = jnp.sum(e22 * mns2, axis=1, keepdims=True)
    psum4 = jnp.sum(mps2, axis=1, keepdims=True)
    l4 = _term_loss(pos4, neg4, psum4, sels2_ref[...])

    out_ref[0, 0] = l1 + l2 + l3 + l4


def scl_independent_loss(features1, features2, mask_cross, mask1, mask2,
                         mask_sents1, mask_sents2, *,
                         temperature=0.07, sim_type='cos',
                         use_only_sents_in_ac=True, base_temperature=0.07,
                         feature_dtype=jnp.bfloat16):
    """Pallas equivalent of SCL_Independent_Loss.forward."""
    del base_temperature  # unused by the reference forward as well
    B1, D = features1.shape
    B2, D2 = features2.shape
    assert D == D2
    assert mask_cross.shape == (B1, B2), 'Num of mask does not match num of features'
    assert mask1.shape == (B1, B1), 'Num of mask1 does not match num of features'
    assert mask2.shape == (B2, B2), 'Num of mask2 does not match num of features'
    assert mask_sents1.shape[0] == B1, 'Num of mask_sents1 does not match num of features'
    assert mask_sents2.shape[0] == B2, 'Num of mask_sents2 does not match num of features'

    f32 = jnp.float32
    mpc = mask_cross.astype(f32)
    off1 = 1.0 - jnp.eye(B1, dtype=f32)
    off2 = 1.0 - jnp.eye(B2, dtype=f32)
    m1 = mask1.astype(f32)
    m2 = mask2.astype(f32)
    mps1 = m1 * off1                    # self positives (diag zeroed)
    mns1 = (1.0 - m1) * off1            # self negatives (diag zeroed)
    mps2 = m2 * off2
    mns2 = (1.0 - m2) * off2

    ms1 = mask_sents1.astype(bool)
    ms2 = mask_sents2.astype(bool)
    has_pos_c1 = jnp.sum(mpc, axis=1) > 0.0
    has_pos_c2 = jnp.sum(mpc, axis=0) > 0.0
    has_pos_s1 = jnp.sum(mps1, axis=1) > 0.0
    has_pos_s2 = jnp.sum(mps2, axis=1) > 0.0
    if use_only_sents_in_ac:
        selc1 = jnp.logical_and(ms1, has_pos_c1)
        selc2 = jnp.logical_and(ms2, has_pos_c2)
        sels1 = jnp.logical_and(ms1, has_pos_s1)
        sels2 = jnp.logical_and(ms2, has_pos_s2)
    else:
        selc1, selc2, sels1, sels2 = has_pos_c1, has_pos_c2, has_pos_s1, has_pos_s2

    selc1 = selc1.astype(f32).reshape(B1, 1)
    selc2 = selc2.astype(f32).reshape(1, B2)   # loss2 reduces e12 over axis 0
    sels1 = sels1.astype(f32).reshape(B1, 1)
    sels2 = sels2.astype(f32).reshape(B2, 1)

    f1 = features1.astype(feature_dtype)       # halve feature DMA bytes
    f2 = features2.astype(feature_dtype)

    kernel = functools.partial(_scl_independent_kernel,
                               inv_temperature=1.0 / float(temperature),
                               sim_type=sim_type)
    vmem = pl.BlockSpec(memory_space=pltpu.MemorySpace.VMEM)
    inputs = (f1, f2, mpc, mps1, mns1, mps2, mns2, selc1, selc2, sels1, sels2)
    cost = pl.CostEstimate(
        flops=int(2 * D * (B1 * B2 + B1 * B1 + B2 * B2)),
        transcendentals=int(B1 * B2 + B1 * B1 + B2 * B2 + B1 + B2),
        bytes_accessed=int(sum(int(np.prod(x.shape)) * x.dtype.itemsize
                               for x in inputs) + 4))
    out = pl.pallas_call(
        kernel,
        out_shape=jax.ShapeDtypeStruct((1, 1), jnp.float32),
        in_specs=[vmem] * len(inputs),
        out_specs=pl.BlockSpec(memory_space=pltpu.MemorySpace.SMEM),
        compiler_params=pltpu.CompilerParams(vmem_limit_bytes=32 * 1024 * 1024),
        cost_estimate=cost,
    )(*inputs)
    return out[0, 0]


def _ref_numpy(features1, features2, mask_cross, mask1, mask2, ms1, ms2,
               temperature=0.07, sim_type='cos', use_only_sents_in_ac=True):
    """Direct float64 numpy transcription of the torch module for verification."""
    f1 = np.asarray(features1, np.float64)
    f2 = np.asarray(features2, np.float64)
    mc = np.asarray(mask_cross, np.float64)
    m1 = np.asarray(mask1, np.float64)
    m2 = np.asarray(mask2, np.float64)
    s1 = np.asarray(ms1, bool)
    s2 = np.asarray(ms2, bool)
    if sim_type == 'cos':
        f1 = f1 / np.maximum(np.linalg.norm(f1, axis=-1, keepdims=True), 1e-12)
        f2 = f2 / np.maximum(np.linalg.norm(f2, axis=-1, keepdims=True), 1e-12)

    def compute_loss(a, c, mask, msents, mode):
        lm = np.ones_like(mask)
        if mode == 'self':
            np.fill_diagonal(lm, 0.0)
        if use_only_sents_in_ac:
            sel = msents & ((mask * lm).sum(-1) > 0)
        else:
            sel = (mask * lm).sum(-1) > 0
        anchor = a[sel]
        mask_pos = (mask * lm)[sel]
        mask_neg = ((1.0 - mask) * lm)[sel]
        sim = np.exp(anchor @ c.T / temperature)
        pos = (sim * mask_pos).sum(1)
        neg = (sim * mask_neg).sum(1)
        with np.errstate(divide='ignore', invalid='ignore'):
            vals = np.log((pos + 1e-8) / (pos + neg + 1e-8)) / mask_pos.sum(1)
            loss = -np.mean(vals) if vals.size else float('nan')
        if not np.isfinite(loss):
            loss = 0.0
        return loss

    l1 = compute_loss(f1, f2, mc, s1, 'cross')
    l2 = compute_loss(f2, f1, mc.T, s2, 'cross')
    l3 = compute_loss(f1, f1, m1, s1, 'self')
    l4 = compute_loss(f2, f2, m2, s2, 'self')
    return np.float32(l1 + l2 + l3 + l4)


if __name__ == "__main__":
    B1, B2, D = 16, 8, 128
    key = jax.random.PRNGKey(0)
    k1, k2, k3, k4, k5, k6, k7 = jax.random.split(key, 7)

    # bf16 feature storage (the dtype the kernel is fed); the reference below is
    # evaluated in float64 on the exact same bf16-rounded values.
    features1 = jax.random.normal(k1, (B1, D), dtype=jnp.float32).astype(jnp.bfloat16)
    features2 = jax.random.normal(k2, (B2, D), dtype=jnp.float32).astype(jnp.bfloat16)

    mask_cross = (jax.random.uniform(k3, (B1, B2)) > 0.6).astype(jnp.float32)
    mask1 = (jax.random.uniform(k4, (B1, B1)) > 0.6).astype(jnp.float32)
    mask2 = (jax.random.uniform(k5, (B2, B2)) > 0.6).astype(jnp.float32)
    mask1 = mask1.at[0, :].set(0.0)   # exercise the "anchor has no positives" filter
    mask_sents1 = jax.random.uniform(k6, (B1,)) > 0.3
    mask_sents2 = jax.random.uniform(k7, (B2,)) > 0.3
    mask_sents1 = mask_sents1.at[1].set(True)
    mask_sents2 = mask_sents2.at[1].set(True)

    loss = scl_independent_loss(features1, features2, mask_cross, mask1, mask2,
                                mask_sents1, mask_sents2,
                                temperature=0.07, sim_type='cos',
                                use_only_sents_in_ac=True)
    loss = jax.block_until_ready(loss)

    ref = _ref_numpy(np.asarray(features1.astype(jnp.float32)),
                     np.asarray(features2.astype(jnp.float32)),
                     np.asarray(mask_cross), np.asarray(mask1), np.asarray(mask2),
                     np.asarray(mask_sents1), np.asarray(mask_sents2),
                     temperature=0.07, sim_type='cos', use_only_sents_in_ac=True)
    np.testing.assert_allclose(np.asarray(loss), ref, rtol=5e-3, atol=1e-4)

    print("KERNEL_OK")
</pallas_src>

<mosaic_0001>
module attributes {stable_mosaic.version = 11 : i64} {
  func.func @_scl_independent_kernel(%arg0: memref<16x128xbf16, #tpu.memory_space<vmem>>, %arg1: memref<8x128xbf16, #tpu.memory_space<vmem>>, %arg2: memref<16x8xf32, #tpu.memory_space<vmem>>, %arg3: memref<16x16xf32, #tpu.memory_space<vmem>>, %arg4: memref<16x16xf32, #tpu.memory_space<vmem>>, %arg5: memref<8x8xf32, #tpu.memory_space<vmem>>, %arg6: memref<8x8xf32, #tpu.memory_space<vmem>>, %arg7: memref<16x1xf32, #tpu.memory_space<vmem>>, %arg8: memref<1x8xf32, #tpu.memory_space<vmem>>, %arg9: memref<16x1xf32, #tpu.memory_space<vmem>>, %arg10: memref<8x1xf32, #tpu.memory_space<vmem>>, %arg11: memref<1x1xf32, #tpu.memory_space<smem>>) attributes {dimension_semantics = [], scalar_prefetch = 0 : i64, scratch_operands = 0 : i64, tpu.core_type = #tpu.core_type<tc>} {
    %c0 = arith.constant 0 : index
    %c0_0 = arith.constant 0 : index
    %0 = vector.load %arg0[%c0, %c0_0] : memref<16x128xbf16, #tpu.memory_space<vmem>>, vector<16x128xbf16>
    %1 = arith.extf %0 : vector<16x128xbf16> to vector<16x128xf32>
    %c0_1 = arith.constant 0 : index
    %c0_2 = arith.constant 0 : index
    %2 = vector.load %arg1[%c0_1, %c0_2] : memref<8x128xbf16, #tpu.memory_space<vmem>>, vector<8x128xbf16>
    %3 = arith.extf %2 : vector<8x128xbf16> to vector<8x128xf32>
    %4 = arith.mulf %1, %1 : vector<16x128xf32>
    %cst = arith.constant dense<0.000000e+00> : vector<16xf32>
    %5 = vector.multi_reduction <add>, %4, %cst [1] : vector<16x128xf32> to vector<16xf32>
    %6 = vector.shape_cast %5 : vector<16xf32> to vector<16x1xf32>
    %7 = math.sqrt %6 : vector<16x1xf32>
    %cst_3 = arith.constant 9.99999996E-13 : f32
    %8 = vector.broadcast %cst_3 : f32 to vector<16x1xf32>
    %9 = arith.maximumf %7, %8 : vector<16x1xf32>
    %10 = vector.broadcast %9 : vector<16x1xf32> to vector<16x128xf32>
    %11 = arith.divf %1, %10 : vector<16x128xf32>
    %12 = arith.mulf %3, %3 : vector<8x128xf32>
    %cst_4 = arith.constant dense<0.000000e+00> : vector<8xf32>
    %13 = vector.multi_reduction <add>, %12, %cst_4 [1] : vector<8x128xf32> to vector<8xf32>
    %14 = vector.shape_cast %13 : vector<8xf32> to vector<8x1xf32>
    %15 = math.sqrt %14 : vector<8x1xf32>
    %cst_5 = arith.constant 9.99999996E-13 : f32
    %16 = vector.broadcast %cst_5 : f32 to vector<8x1xf32>
    %17 = arith.maximumf %15, %16 : vector<8x1xf32>
    %18 = vector.broadcast %17 : vector<8x1xf32> to vector<8x128xf32>
    %19 = arith.divf %3, %18 : vector<8x128xf32>
    %cst_6 = arith.constant dense<0.000000e+00> : vector<16x8xf32>
    %20 = tpu.matmul %11, %19, %cst_6 {dimension_numbers = #tpu.dot_dimension_numbers<[1], [1], [0], [0], [0, 0, 1, 0], [], []>} : vector<16x128xf32>, vector<8x128xf32>, vector<16x8xf32> -> vector<16x8xf32>
    %cst_7 = arith.constant 14.2857141 : f32
    %21 = vector.broadcast %cst_7 : f32 to vector<16x8xf32>
    %22 = arith.mulf %20, %21 : vector<16x8xf32>
    %23 = math.exp %22 : vector<16x8xf32>
    %cst_8 = arith.constant dense<0.000000e+00> : vector<16x16xf32>
    %24 = tpu.matmul %11, %11, %cst_8 {dimension_numbers = #tpu.dot_dimension_numbers<[1], [1], [0], [0], [0, 0, 1, 0], [], []>} : vector<16x128xf32>, vector<16x128xf32>, vector<16x16xf32> -> vector<16x16xf32>
    %cst_9 = arith.constant 14.2857141 : f32
    %25 = vector.broadcast %cst_9 : f32 to vector<16x16xf32>
    %26 = arith.mulf %24, %25 : vector<16x16xf32>
    %27 = math.exp %26 : vector<16x16xf32>
    %cst_10 = arith.constant dense<0.000000e+00> : vector<8x8xf32>
    %28 = tpu.matmul %19, %19, %cst_10 {dimension_numbers = #tpu.dot_dimension_numbers<[1], [1], [0], [0], [0, 0, 1, 0], [], []>} : vector<8x128xf32>, vector<8x128xf32>, vector<8x8xf32> -> vector<8x8xf32>
    %cst_11 = arith.constant 14.2857141 : f32
    %29 = vector.broadcast %cst_11 : f32 to vector<8x8xf32>
    %30 = arith.mulf %28, %29 : vector<8x8xf32>
    %31 = math.exp %30 : vector<8x8xf32>
    %c0_12 = arith.constant 0 : index
    %c0_13 = arith.constant 0 : index
    %32 = vector.load %arg2[%c0_12, %c0_13] : memref<16x8xf32, #tpu.memory_space<vmem>>, vector<16x8xf32>
    %c0_14 = arith.constant 0 : index
    %c0_15 = arith.constant 0 : index
    %33 = vector.load %arg3[%c0_14, %c0_15] : memref<16x16xf32, #tpu.memory_space<vmem>>, vector<16x16xf32>
    %c0_16 = arith.constant 0 : index
    %c0_17 = arith.constant 0 : index
    %34 = vector.load %arg4[%c0_16, %c0_17] : memref<16x16xf32, #tpu.memory_space<vmem>>, vector<16x16xf32>
    %c0_18 = arith.constant 0 : index
    %c0_19 = arith.constant 0 : index
    %35 = vector.load %arg5[%c0_18, %c0_19] : memref<8x8xf32, #tpu.memory_space<vmem>>, vector<8x8xf32>
    %c0_20 = arith.constant 0 : index
    %c0_21 = arith.constant 0 : index
    %36 = vector.load %arg6[%c0_20, %c0_21] : memref<8x8xf32, #tpu.memory_space<vmem>>, vector<8x8xf32>
    %37 = arith.mulf %23, %32 : vector<16x8xf32>
    %cst_22 = arith.constant dense<0.000000e+00> : vector<16xf32>
    %38 = vector.multi_reduction <add>, %37, %cst_22 [1] : vector<16x8xf32> to vector<16xf32>
    %39 = vector.shape_cast %38 : vector<16xf32> to vector<16x1xf32>
    %cst_23 = arith.constant dense<0.000000e+00> : vector<16xf32>
    %40 = vector.multi_reduction <add>, %23, %cst_23 [1] : vector<16x8xf32> to vector<16xf32>
    %41 = vector.shape_cast %40 : vector<16xf32> to vector<16x1xf32>
    %cst_24 = arith.constant dense<0.000000e+00> : vector<16xf32>
    %42 = vector.multi_reduction <add>, %32, %cst_24 [1] : vector<16x8xf32> to vector<16xf32>
    %43 = vector.shape_cast %42 : vector<16xf32> to vector<16x1xf32>
    %44 = arith.subf %41, %39 : vector<16x1xf32>
    %c0_25 = arith.constant 0 : index
    %c0_26 = arith.constant 0 : index
    %45 = vector.load %arg7[%c0_25, %c0_26] : memref<16x1xf32, #tpu.memory_space<vmem>>, vector<16x1xf32>
    %cst_27 = arith.constant 9.99999993E-9 : f32
    %46 = vector.broadcast %cst_27 : f32 to vector<16x1xf32>
    %47 = arith.addf %39, %46 : vector<16x1xf32>
    %48 = arith.addf %39, %44 : vector<16x1xf32>
    %cst_28 = arith.constant 9.99999993E-9 : f32
    %49 = vector.broadcast %cst_28 : f32 to vector<16x1xf32>
    %50 = arith.addf %48, %49 : vector<16x1xf32>
    %51 = arith.divf %47, %50 : vector<16x1xf32>
    %52 = math.log %51 : vector<16x1xf32>
    %cst_29 = arith.constant 1.000000e-30 : f32
    %53 = vector.broadcast %cst_29 : f32 to vector<16x1xf32>
    %54 = arith.maximumf %43, %53 : vector<16x1xf32>
    %55 = arith.divf %52, %54 : vector<16x1xf32>
    %cst_30 = arith.constant 0.000000e+00 : f32
    %56 = vector.broadcast %cst_30 : f32 to vector<16x1xf32>
    %57 = arith.cmpf ogt, %45, %56 : vector<16x1xf32>
    %cst_31 = arith.constant 0.000000e+00 : f32
    %58 = vector.broadcast %cst_31 : f32 to vector<16x1xf32>
    %59 = arith.select %57, %55, %58 : vector<16x1xi1>, vector<16x1xf32>
    %60 = vector.shape_cast %45 : vector<16x1xf32> to vector<1x16x1xf32>
    %cst_32 = arith.constant dense<0.000000e+00> : vector<1xf32>
    %61 = vector.multi_reduction <add>, %60, %cst_32 [1, 2] : vector<1x16x1xf32> to vector<1xf32>
    %62 = vector.shape_cast %61 : vector<1xf32> to vector<1x1x1xf32>
    %63 = vector.extract %62[0, 0, 0] : f32 from vector<1x1x1xf32>
    %64 = vector.shape_cast %59 : vector<16x1xf32> to vector<1x16x1xf32>
    %cst_33 = arith.constant dense<0.000000e+00> : vector<1xf32>
    %65 = vector.multi_reduction <add>, %64, %cst_33 [1, 2] : vector<1x16x1xf32> to vector<1xf32>
    %66 = vector.shape_cast %65 : vector<1xf32> to vector<1x1x1xf32>
    %67 = vector.extract %66[0, 0, 0] : f32 from vector<1x1x1xf32>
    %cst_34 = arith.constant 1.000000e+00 : f32
    %68 = arith.maximumf %63, %cst_34 : f32
    %69 = arith.divf %67, %68 : f32
    %cst_35 = arith.constant 0.000000e+00 : f32
    %70 = arith.subf %cst_35, %69 : f32
    %cst_36 = arith.constant 0.000000e+00 : f32
    %71 = arith.cmpf ogt, %63, %cst_36 : f32
    %cst_37 = arith.constant 0.000000e+00 : f32
    %72 = arith.select %71, %70, %cst_37 : f32
    %73 = arith.cmpf oeq, %72, %72 : f32
    %74 = math.absf %72 : f32
    %cst_38 = arith.constant 3.000000e+38 : f32
    %75 = arith.cmpf olt, %74, %cst_38 : f32
    %76 = arith.andi %73, %75 : i1
    %cst_39 = arith.constant 0.000000e+00 : f32
    %77 = arith.select %76, %72, %cst_39 : f32
    %78 = arith.mulf %23, %32 : vector<16x8xf32>
    %cst_40 = arith.constant dense<0.000000e+00> : vector<8xf32>
    %79 = vector.multi_reduction <add>, %78, %cst_40 [0] : vector<16x8xf32> to vector<8xf32>
    %80 = vector.shape_cast %79 : vector<8xf32> to vector<1x8xf32>
    %cst_41 = arith.constant dense<0.000000e+00> : vector<8xf32>
    %81 = vector.multi_reduction <add>, %23, %cst_41 [0] : vector<16x8xf32> to vector<8xf32>
    %82 = vector.shape_cast %81 : vector<8xf32> to vector<1x8xf32>
    %cst_42 = arith.constant dense<0.000000e+00> : vector<8xf32>
    %83 = vector.multi_reduction <add>, %32, %cst_42 [0] : vector<16x8xf32> to vector<8xf32>
    %84 = vector.shape_cast %83 : vector<8xf32> to vector<1x8xf32>
    %85 = arith.subf %82, %80 : vector<1x8xf32>
    %c0_43 = arith.constant 0 : index
    %c0_44 = arith.constant 0 : index
    %86 = vector.load %arg8[%c0_43, %c0_44] : memref<1x8xf32, #tpu.memory_space<vmem>>, vector<1x8xf32>
    %cst_45 = arith.constant 9.99999993E-9 : f32
    %87 = vector.broadcast %cst_45 : f32 to vector<1x8xf32>
    %88 = arith.addf %80, %87 : vector<1x8xf32>
    %89 = arith.addf %80, %85 : vector<1x8xf32>
    %cst_46 = arith.constant 9.99999993E-9 : f32
    %90 = vector.broadcast %cst_46 : f32 to vector<1x8xf32>
    %91 = arith.addf %89, %90 : vector<1x8xf32>
    %92 = arith.divf %88, %91 : vector<1x8xf32>
    %93 = math.log %92 : vector<1x8xf32>
    %cst_47 = arith.constant 1.000000e-30 : f32
    %94 = vector.broadcast %cst_47 : f32 to vector<1x8xf32>
    %95 = arith.maximumf %84, %94 : vector<1x8xf32>
    %96 = arith.divf %93, %95 : vector<1x8xf32>
    %cst_48 = arith.constant 0.000000e+00 : f32
    %97 = vector.broadcast %cst_48 : f32 to vector<1x8xf32>
    %98 = arith.cmpf ogt, %86, %97 : vector<1x8xf32>
    %cst_49 = arith.constant 0.000000e+00 : f32
    %99 = vector.broadcast %cst_49 : f32 to vector<1x8xf32>
    %100 = arith.select %98, %96, %99 : vector<1x8xi1>, vector<1x8xf32>
    %101 = vector.shape_cast %86 : vector<1x8xf32> to vector<1x1x8xf32>
    %cst_50 = arith.constant dense<0.000000e+00> : vector<1xf32>
    %102 = vector.multi_reduction <add>, %101, %cst_50 [1, 2] : vector<1x1x8xf32> to vector<1xf32>
    %103 = vector.shape_cast %102 : vector<1xf32> to vector<1x1x1xf32>
    %104 = vector.extract %103[0, 0, 0] : f32 from vector<1x1x1xf32>
    %105 = vector.shape_cast %100 : vector<1x8xf32> to vector<1x1x8xf32>
    %cst_51 = arith.constant dense<0.000000e+00> : vector<1xf32>
    %106 = vector.multi_reduction <add>, %105, %cst_51 [1, 2] : vector<1x1x8xf32> to vector<1xf32>
    %107 = vector.shape_cast %106 : vector<1xf32> to vector<1x1x1xf32>
    %108 = vector.extract %107[0, 0, 0] : f32 from vector<1x1x1xf32>
    %cst_52 = arith.constant 1.000000e+00 : f32
    %109 = arith.maximumf %104, %cst_52 : f32
    %110 = arith.divf %108, %109 : f32
    %cst_53 = arith.constant 0.000000e+00 : f32
    %111 = arith.subf %cst_53, %110 : f32
    %cst_54 = arith.constant 0.000000e+00 : f32
    %112 = arith.cmpf ogt, %104, %cst_54 : f32
    %cst_55 = arith.constant 0.000000e+00 : f32
    %113 = arith.select %112, %111, %cst_55 : f32
    %114 = arith.cmpf oeq, %113, %113 : f32
    %115 = math.absf %113 : f32
    %cst_56 = arith.constant 3.000000e+38 : f32
    %116 = arith.cmpf olt, %115, %cst_56 : f32
    %117 = arith.andi %114, %116 : i1
    %cst_57 = arith.constant 0.000000e+00 : f32
    %118 = arith.select %117, %113, %cst_57 : f32
    %119 = arith.mulf %27, %33 : vector<16x16xf32>
    %cst_58 = arith.constant dense<0.000000e+00> : vector<16xf32>
    %120 = vector.multi_reduction <add>, %119, %cst_58 [1] : vector<16x16xf32> to vector<16xf32>
    %121 = vector.shape_cast %120 : vector<16xf32> to vector<16x1xf32>
    %122 = arith.mulf %27, %34 : vector<16x16xf32>
    %cst_59 = arith.constant dense<0.000000e+00> : vector<16xf32>
    %123 = vector.multi_reduction <add>, %122, %cst_59 [1] : vector<16x16xf32> to vector<16xf32>
    %124 = vector.shape_cast %123 : vector<16xf32> to vector<16x1xf32>
    %cst_60 = arith.constant dense<0.000000e+00> : vector<16xf32>
    %125 = vector.multi_reduction <add>, %33, %cst_60 [1] : vector<16x16xf32> to vector<16xf32>
    %126 = vector.shape_cast %125 : vector<16xf32> to vector<16x1xf32>
    %c0_61 = arith.constant 0 : index
    %c0_62 = arith.constant 0 : index
    %127 = vector.load %arg9[%c0_61, %c0_62] : memref<16x1xf32, #tpu.memory_space<vmem>>, vector<16x1xf32>
    %cst_63 = arith.constant 9.99999993E-9 : f32
    %128 = vector.broadcast %cst_63 : f32 to vector<16x1xf32>
    %129 = arith.addf %121, %128 : vector<16x1xf32>
    %130 = arith.addf %121, %124 : vector<16x1xf32>
    %cst_64 = arith.constant 9.99999993E-9 : f32
    %131 = vector.broadcast %cst_64 : f32 to vector<16x1xf32>
    %132 = arith.addf %130, %131 : vector<16x1xf32>
    %133 = arith.divf %129, %132 : vector<16x1xf32>
    %134 = math.log %133 : vector<16x1xf32>
    %cst_65 = arith.constant 1.000000e-30 : f32
    %135 = vector.broadcast %cst_65 : f32 to vector<16x1xf32>
    %136 = arith.maximumf %126, %135 : vector<16x1xf32>
    %137 = arith.divf %134, %136 : vector<16x1xf32>
    %cst_66 = arith.constant 0.000000e+00 : f32
    %138 = vector.broadcast %cst_66 : f32 to vector<16x1xf32>
    %139 = arith.cmpf ogt, %127, %138 : vector<16x1xf32>
    %cst_67 = arith.constant 0.000000e+00 : f32
    %140 = vector.broadcast %cst_67 : f32 to vector<16x1xf32>
    %141 = arith.select %139, %137, %140 : vector<16x1xi1>, vector<16x1xf32>
    %142 = vector.shape_cast %127 : vector<16x1xf32> to vector<1x16x1xf32>
    %cst_68 = arith.constant dense<0.000000e+00> : vector<1xf32>
    %143 = vector.multi_reduction <add>, %142, %cst_68 [1, 2] : vector<1x16x1xf32> to vector<1xf32>
    %144 = vector.shape_cast %143 : vector<1xf32> to vector<1x1x1xf32>
    %145 = vector.extract %144[0, 0, 0] : f32 from vector<1x1x1xf32>
    %146 = vector.shape_cast %141 : vector<16x1xf32> to vector<1x16x1xf32>
    %cst_69 = arith.constant dense<0.000000e+00> : vector<1xf32>
    %147 = vector.multi_reduction <add>, %146, %cst_69 [1, 2] : vector<1x16x1xf32> to vector<1xf32>
    %148 = vector.shape_cast %147 : vector<1xf32> to vector<1x1x1xf32>
    %149 = vector.extract %148[0, 0, 0] : f32 from vector<1x1x1xf32>
    %cst_70 = arith.constant 1.000000e+00 : f32
    %150 = arith.maximumf %145, %cst_70 : f32
    %151 = arith.divf %149, %150 : f32
    %cst_71 = arith.constant 0.000000e+00 : f32
    %152 = arith.subf %cst_71, %151 : f32
    %cst_72 = arith.constant 0.000000e+00 : f32
    %153 = arith.cmpf ogt, %145, %cst_72 : f32
    %cst_73 = arith.constant 0.000000e+00 : f32
    %154 = arith.select %153, %152, %cst_73 : f32
    %155 = arith.cmpf oeq, %154, %154 : f32
    %156 = math.absf %154 : f32
    %cst_74 = arith.constant 3.000000e+38 : f32
    %157 = arith.cmpf olt, %156, %cst_74 : f32
    %158 = arith.andi %155, %157 : i1
    %cst_75 = arith.constant 0.000000e+00 : f32
    %159 = arith.select %158, %154, %cst_75 : f32
    %160 = arith.mulf %31, %35 : vector<8x8xf32>
    %cst_76 = arith.constant dense<0.000000e+00> : vector<8xf32>
    %161 = vector.multi_reduction <add>, %160, %cst_76 [1] : vector<8x8xf32> to vector<8xf32>
    %162 = vector.shape_cast %161 : vector<8xf32> to vector<8x1xf32>
    %163 = arith.mulf %31, %36 : vector<8x8xf32>
    %cst_77 = arith.constant dense<0.000000e+00> : vector<8xf32>
    %164 = vector.multi_reduction <add>, %163, %cst_77 [1] : vector<8x8xf32> to vector<8xf32>
    %165 = vector.shape_cast %164 : vector<8xf32> to vector<8x1xf32>
    %cst_78 = arith.constant dense<0.000000e+00> : vector<8xf32>
    %166 = vector.multi_reduction <add>, %35, %cst_78 [1] : vector<8x8xf32> to vector<8xf32>
    %167 = vector.shape_cast %166 : vector<8xf32> to vector<8x1xf32>
    %c0_79 = arith.constant 0 : index
    %c0_80 = arith.constant 0 : index
    %168 = vector.load %arg10[%c0_79, %c0_80] : memref<8x1xf32, #tpu.memory_space<vmem>>, vector<8x1xf32>
    %cst_81 = arith.constant 9.99999993E-9 : f32
    %169 = vector.broadcast %cst_81 : f32 to vector<8x1xf32>
    %170 = arith.addf %162, %169 : vector<8x1xf32>
    %171 = arith.addf %162, %165 : vector<8x1xf32>
    %cst_82 = arith.constant 9.99999993E-9 : f32
    %172 = vector.broadcast %cst_82 : f32 to vector<8x1xf32>
    %173 = arith.addf %171, %172 : vector<8x1xf32>
    %174 = arith.divf %170, %173 : vector<8x1xf32>
    %175 = math.log %174 : vector<8x1xf32>
    %cst_83 = arith.constant 1.000000e-30 : f32
    %176 = vector.broadcast %cst_83 : f32 to vector<8x1xf32>
    %177 = arith.maximumf %167, %176 : vector<8x1xf32>
    %178 = arith.divf %175, %177 : vector<8x1xf32>
    %cst_84 = arith.constant 0.000000e+00 : f32
    %179 = vector.broadcast %cst_84 : f32 to vector<8x1xf32>
    %180 = arith.cmpf ogt, %168, %179 : vector<8x1xf32>
    %cst_85 = arith.constant 0.000000e+00 : f32
    %181 = vector.broadcast %cst_85 : f32 to vector<8x1xf32>
    %182 = arith.select %180, %178, %181 : vector<8x1xi1>, vector<8x1xf32>
    %183 = vector.shape_cast %168 : vector<8x1xf32> to vector<1x8x1xf32>
    %cst_86 = arith.constant dense<0.000000e+00> : vector<1xf32>
    %184 = vector.multi_reduction <add>, %183, %cst_86 [1, 2] : vector<1x8x1xf32> to vector<1xf32>
    %185 = vector.shape_cast %184 : vector<1xf32> to vector<1x1x1xf32>
    %186 = vector.extract %185[0, 0, 0] : f32 from vector<1x1x1xf32>
    %187 = vector.shape_cast %182 : vector<8x1xf32> to vector<1x8x1xf32>
    %cst_87 = arith.constant dense<0.000000e+00> : vector<1xf32>
    %188 = vector.multi_reduction <add>, %187, %cst_87 [1, 2] : vector<1x8x1xf32> to vector<1xf32>
    %189 = vector.shape_cast %188 : vector<1xf32> to vector<1x1x1xf32>
    %190 = vector.extract %189[0, 0, 0] : f32 from vector<1x1x1xf32>
    %cst_88 = arith.constant 1.000000e+00 : f32
    %191 = arith.maximumf %186, %cst_88 : f32
    %192 = arith.divf %190, %191 : f32
    %cst_89 = arith.constant 0.000000e+00 : f32
    %193 = arith.subf %cst_89, %192 : f32
    %cst_90 = arith.constant 0.000000e+00 : f32
    %194 = arith.cmpf ogt, %186, %cst_90 : f32
    %cst_91 = arith.constant 0.000000e+00 : f32
    %195 = arith.select %194, %193, %cst_91 : f32
    %196 = arith.cmpf oeq, %195, %195 : f32
    %197 = math.absf %195 : f32
    %cst_92 = arith.constant 3.000000e+38 : f32
    %198 = arith.cmpf olt, %197, %cst_92 : f32
    %199 = arith.andi %196, %198 : i1
    %cst_93 = arith.constant 0.000000e+00 : f32
    %200 = arith.select %199, %195, %cst_93 : f32
    %201 = arith.addf %77, %118 : f32
    %202 = arith.addf %201, %159 : f32
    %203 = arith.addf %202, %200 : f32
    %c0_94 = arith.constant 0 : index
    %c0_95 = arith.constant 0 : index
    %204 = memref.load %arg11[%c0_94, %c0_95] : memref<1x1xf32, #tpu.memory_space<smem>>
    memref.store %203, %arg11[%c0_94, %c0_95] : memref<1x1xf32, #tpu.memory_space<smem>>
    return
  }
}

</mosaic_0001>

<llo_original>
// kernel: tpu_custom_call.1
$region0: #{tpu_custom_call.1}
  #allocation0 [shape = 'u32[]', space=smem, size = 0x4, offset = 0x4, fixed_abs, tag = 'smem constant byte address 0x4 - core index']
  #allocation1 [shape = 'u32[72,128]{1,0:T(1,128)}', space=vmem, size = 0x9000, scoped, tag = 'internal scratch']
  %s0 = inlined_call_operand.vmem [shape: bf16[16,128], index: 0, kind: input, shape index: {}]
  %s1 = inlined_call_operand.vmem [shape: bf16[8,128], index: 1, kind: input, shape index: {}]
  %s2 = inlined_call_operand.vmem [shape: f32[16,8], index: 2, kind: input, shape index: {}]
  %s3 = inlined_call_operand.vmem [shape: f32[16,16], index: 3, kind: input, shape index: {}]
  %s4 = inlined_call_operand.vmem [shape: f32[16,16], index: 4, kind: input, shape index: {}]
  %s5 = inlined_call_operand.vmem [shape: f32[8,8], index: 5, kind: input, shape index: {}]
  %s6 = inlined_call_operand.vmem [shape: f32[8,8], index: 6, kind: input, shape index: {}]
  %s7 = inlined_call_operand.vmem [shape: f32[16,1], index: 7, kind: input, shape index: {}]
  %s8 = inlined_call_operand.vmem [shape: f32[1,8], index: 8, kind: input, shape index: {}]
  %s9 = inlined_call_operand.vmem [shape: f32[16,1], index: 9, kind: input, shape index: {}]
  %s10 = inlined_call_operand.vmem [shape: f32[8,1], index: 10, kind: input, shape index: {}]
  %s11 = inlined_call_operand.hbm [shape: f32[1,1], index: 11, kind: output, shape index: {}]
  %s12 = sld [smem:[#allocation0]]
  $region54: #{tpu_custom_call.1} parent=0
    _
  %s14 = ssub.s32 1, %s12
  %s15 = scalar_select 0, %s14, %s12
  $region1: #{tpu_custom_call.1} parent=0
    #allocation2 [shape = 'u8[512]{0}', space=smem, size = 0x200, scoped, tag = 'output window, operand 0, single buffered']
    #allocation3 [shape = 's32[1]{0}', space=sflag, size = 0x4, scoped, tag = 'scoped memory for tpu_custom_call.1']
    %16 = vsyncpa [#allocation3], 0
    // Predicated region
    $region2: #{tpu_custom_call.1} parent=1 // pred_check
      _
    $region3: #{tpu_custom_call.1} parent=1 // pred_check_branch
      %18 = sbr.rel (0) target = $region5
    $region4: #{tpu_custom_call.1} parent=1 // pred_region
      _
    $region5: #{tpu_custom_call.1} parent=1 // pred_fallthru
      _
    // Predicated region
    $region6: #{tpu_custom_call.1} parent=1 // pred_check
      _
    $region7: #{tpu_custom_call.1} parent=1 // pred_check_branch
      %20 = sbr.rel (0) target = $region9
    $region8: #{tpu_custom_call.1} parent=1 // pred_region
      _
    $region9: #{tpu_custom_call.1} parent=1 // pred_fallthru
      _
    // Predicated region
    $region10: #{tpu_custom_call.1} parent=1 // pred_check
      _
    $region11: #{tpu_custom_call.1} parent=1 // pred_check_branch
      %22 = sbr.rel (0) target = $region13
    $region12: #{tpu_custom_call.1} parent=1 // pred_region
      _
    $region13: #{tpu_custom_call.1} parent=1 // pred_fallthru
      _
    // Predicated region
    $region14: #{tpu_custom_call.1} parent=1 // pred_check
      _
    $region15: #{tpu_custom_call.1} parent=1 // pred_check_branch
      %24 = sbr.rel (0) target = $region17
    $region16: #{tpu_custom_call.1} parent=1 // pred_region
      _
    $region17: #{tpu_custom_call.1} parent=1 // pred_fallthru
      _
    // Predicated region
    $region18: #{tpu_custom_call.1} parent=1 // pred_check
      _
    $region19: #{tpu_custom_call.1} parent=1 // pred_check_branch
      %26 = sbr.rel (0) target = $region21
    $region20: #{tpu_custom_call.1} parent=1 // pred_region
      _
    $region21: #{tpu_custom_call.1} parent=1 // pred_fallthru
      _
    // Predicated region
    $region22: #{tpu_custom_call.1} parent=1 // pred_check
      _
    $region23: #{tpu_custom_call.1} parent=1 // pred_check_branch
      %28 = sbr.rel (0) target = $region25
    $region24: #{tpu_custom_call.1} parent=1 // pred_region
      _
    $region25: #{tpu_custom_call.1} parent=1 // pred_fallthru
      _
    // Predicated region
    $region26: #{tpu_custom_call.1} parent=1 // pred_check
      _
    $region27: #{tpu_custom_call.1} parent=1 // pred_check_branch
      %30 = sbr.rel (0) target = $region29
    $region28: #{tpu_custom_call.1} parent=1 // pred_region
      _
    $region29: #{tpu_custom_call.1} parent=1 // pred_fallthru
      _
    // Predicated region
    $region30: #{tpu_custom_call.1} parent=1 // pred_check
      _
    $region31: #{tpu_custom_call.1} parent=1 // pred_check_branch
      %32 = sbr.rel (0) target = $region33
    $region32: #{tpu_custom_call.1} parent=1 // pred_region
      _
    $region33: #{tpu_custom_call.1} parent=1 // pred_fallthru
      _
    // Predicated region
    $region34: #{tpu_custom_call.1} parent=1 // pred_check
      _
    $region35: #{tpu_custom_call.1} parent=1 // pred_check_branch
      %34 = sbr.rel (0) target = $region37
    $region36: #{tpu_custom_call.1} parent=1 // pred_region
      _
    $region37: #{tpu_custom_call.1} parent=1 // pred_fallthru
      _
    // Predicated region
    $region38: #{tpu_custom_call.1} parent=1 // pred_check
      _
    $region39: #{tpu_custom_call.1} parent=1 // pred_check_branch
      %36 = sbr.rel (0) target = $region41
    $region40: #{tpu_custom_call.1} parent=1 // pred_region
      _
    $region41: #{tpu_custom_call.1} parent=1 // pred_fallthru
      _
    // Predicated region
    $region42: #{tpu_custom_call.1} parent=1 // pred_check
      _
    $region43: #{tpu_custom_call.1} parent=1 // pred_check_branch
      %38 = sbr.rel (0) target = $region45
    $region44: #{tpu_custom_call.1} parent=1 // pred_region
      _
    $region45: #{tpu_custom_call.1} parent=1 // pred_fallthru
      _
    %v39 = vld [vmem:[%s0] sm:$0xf]
    %v40 = vld [vmem:[%s0 + $0x4] sm:$0xf]
    %v41 = vunpack.c.l.bf16 %v39
    %v42 = vunpack.c.l.bf16 %v40
    %v43 = vld [vmem:[%s1] sm:$0xf]
    %v44 = vunpack.c.l.bf16 %v43
    %v45 = vmul.f32 %v41, %v41
    %v46 = vmul.f32 %v42, %v42
    %47 = vadd.xlane.f32.xlu0 %v45
    %v48 = vpop.xlane.xlu0 %47
    %49 = vadd.xlane.f32.xlu0 %v46
    %v50 = vpop.xlane.xlu0 %49
    %v51 = vrsqrt.pop %v48
    %v52 = vmul.f32 %v51, %v48
    %v53 = vmul.f32 %v52, %v51
    %v54 = vmul.f32 0.5, %v53
    %v55 = vsub.f32 1.5, %v54
    %v56 = vmul.f32 %v51, %v55
    %v57 = vmul.f32 %v48, %v56
    %vm58 = vcmp.eq.f32.partialorder %v48, inf
    %v59 = vsel %vm58, %v48, %v57
    %vm60 = vcmp.eq.f32.partialorder %v48, 0.0
    %v61 = vand.u32 %v48, 2147483648
    %v62 = vsel %vm60, %v61, %v59
    %v63 = vrsqrt.pop %v50
    %v64 = vmul.f32 %v63, %v50
    %v65 = vmul.f32 %v64, %v63
    %v66 = vmul.f32 0.5, %v65
    %v67 = vsub.f32 1.5, %v66
    %v68 = vmul.f32 %v63, %v67
    %v69 = vmul.f32 %v50, %v68
    %vm70 = vcmp.eq.f32.partialorder %v50, inf
    %v71 = vsel %vm70, %v50, %v69
    %vm72 = vcmp.eq.f32.partialorder %v50, 0.0
    %v73 = vand.u32 %v50, 2147483648
    %v74 = vsel %vm72, %v73, %v71
    %v75 = vmax.f32 %v62, 1e-12
    %v76 = vmax.f32 %v74, 1e-12
    %v77 = vrcp.pop %v75
    %v78 = vmul.f32 %v75, %v77
    %v79 = vsub.f32 1.0, %v78
    %v80 = vmul.f32 %v77, %v79
    %v81 = vadd.f32 %v77, %v80
    %vm82 = vweird.f32 %v75
    %vm83 = vweird.f32 %v77
    %vm84 = vmor %vm82, %vm83
    %v85 = vsel %vm84, %v77, %v81
    %v86 = vand.u32 2147483647, %v75
    %vm87 = vcmp.eq.f32.partialorder %v86, 8.507059e+37
    %v88 = vand.u32 %v75, 2147483648
    %v89 = vor.u32 1.1754944e-38, %v88
    %v90 = vsel %vm87, %v89, %v85
    %v91 = vmul.f32 %v41, %v90
    %v92 = vrcp.pop %v76
    %v93 = vmul.f32 %v76, %v92
    %v94 = vsub.f32 1.0, %v93
    %v95 = vmul.f32 %v92, %v94
    %v96 = vadd.f32 %v92, %v95
    %vm97 = vweird.f32 %v76
    %vm98 = vweird.f32 %v92
    %vm99 = vmor %vm97, %vm98
    %v100 = vsel %vm99, %v92, %v96
    %v101 = vand.u32 2147483647, %v76
    %vm102 = vcmp.eq.f32.partialorder %v101, 8.507059e+37
    %v103 = vand.u32 %v76, 2147483648
    %v104 = vor.u32 1.1754944e-38, %v103
    %v105 = vsel %vm102, %v104, %v100
    %v106 = vmul.f32 %v42, %v105
    %v107 = vmul.f32 %v44, %v44
    %108 = vadd.xlane.f32.xlu0 %v107
    %v109 = vpop.xlane.xlu0 %108
    %v110 = vrsqrt.pop %v109
    %v111 = vmul.f32 %v110, %v109
    %v112 = vmul.f32 %v111, %v110
    %v113 = vmul.f32 0.5, %v112
    %v114 = vsub.f32 1.5, %v113
    %v115 = vmul.f32 %v110, %v114
    %v116 = vmul.f32 %v109, %v115
    %vm117 = vcmp.eq.f32.partialorder %v109, inf
    %v118 = vsel %vm117, %v109, %v116
    %vm119 = vcmp.eq.f32.partialorder %v109, 0.0
    %v120 = vand.u32 %v109, 2147483648
    %v121 = vsel %vm119, %v120, %v118
    %v122 = vmax.f32 %v121, 1e-12
    %v123 = vrcp.pop %v122
    %v124 = vmul.f32 %v122, %v123
    %v125 = vsub.f32 1.0, %v124
    %v126 = vmul.f32 %v123, %v125
    %v127 = vadd.f32 %v123, %v126
    %vm128 = vweird.f32 %v122
    %vm129 = vweird.f32 %v123
    %vm130 = vmor %vm128, %vm129
    %v131 = vsel %vm130, %v123, %v127
    %v132 = vand.u32 2147483647, %v122
    %vm133 = vcmp.eq.f32.partialorder %v132, 8.507059e+37
    %v134 = vand.u32 %v122, 2147483648
    %v135 = vor.u32 1.1754944e-38, %v134
    %v136 = vsel %vm133, %v135, %v131
    %v137 = vmul.f32 %v44, %v136
    %138 = vmatpush.xpose.msra.mxu0 0.0
    %139 = vmatpush.xpose.msra.mxu0 0.0
    %140 = vmatpush.xpose.msra.mxu0 0.0
    %141 = vmatpush.xpose.msra.mxu0 0.0
    %142 = vmatpush.xpose.msra.mxu0 0.0
    %143 = vmatpush.xpose.msra.mxu0 0.0
    %144 = vmatpush.xpose.msra.mxu0 0.0
    %145 = vmatpush.xpose.msra.mxu0 0.0
    %146 = vmatpush.xpose.msra.mxu0 0.0
    %147 = vmatpush.xpose.msra.mxu0 0.0
    %148 = vmatpush.xpose.msra.mxu0 0.0
    %149 = vmatpush.xpose.msra.mxu0 0.0
    %150 = vmatpush.xpose.msra.mxu0 0.0
    %151 = vmatpush.xpose.msra.mxu0 0.0
    %152 = vmatpush.xpose.msra.mxu0 0.0
    %153 = vmatpush.xpose.msra.mxu0 %v137
    %154 = vmatmul.f32.gmra.mxu0 %v91
    %v155 = vpop.f32.mrf.mxu0
    %v156 = vadd.f32 0.0, %v155
    %157 = vmatmul.f32.gmra.mxu0 %v106
    %v158 = vpop.f32.mrf.mxu0
    %v159 = vadd.f32 0.0, %v158
    %160 = vdwg.mxu0
    %v161 = vmul.f32 %v156, 14.285714
    %v162 = vmul.f32 %v159, 14.285714
    %v163 = vmul.f32 %v161, 1.442695
    %v164 = vpow.pop %v163
    %v165 = vmul.f32 %v162, 1.442695
    %v166 = vpow.pop %v165
    %167 = vmatpush.xpose.msra.mxu0 0.0
    %168 = vmatpush.xpose.msra.mxu0 0.0
    %169 = vmatpush.xpose.msra.mxu0 0.0
    %170 = vmatpush.xpose.msra.mxu0 0.0
    %171 = vmatpush.xpose.msra.mxu0 0.0
    %172 = vmatpush.xpose.msra.mxu0 0.0
    %173 = vmatpush.xpose.msra.mxu0 0.0
    %174 = vmatpush.xpose.msra.mxu0 0.0
    %175 = vmatpush.xpose.msra.mxu0 0.0
    %176 = vmatpush.xpose.msra.mxu0 0.0
    %177 = vmatpush.xpose.msra.mxu0 0.0
    %178 = vmatpush.xpose.msra.mxu0 0.0
    %179 = vmatpush.xpose.msra.mxu0 0.0
    %180 = vmatpush.xpose.msra.mxu0 0.0
    %181 = vmatpush.xpose.msra.mxu0 %v106
    %182 = vmatpush.xpose.msra.mxu0 %v91
    %183 = vmatmul.f32.gmra.mxu0 %v91
    %v184 = vpop.f32.mrf.mxu0
    %v185 = vadd.f32 0.0, %v184
    %186 = vmatmul.f32.gmra.mxu0 %v106
    %v187 = vpop.f32.mrf.mxu0
    %v188 = vadd.f32 0.0, %v187
    %189 = vdwg.mxu0
    %v190 = vmul.f32 %v185, 14.285714
    %v191 = vmul.f32 %v188, 14.285714
    %v192 = vmul.f32 %v190, 1.442695
    %v193 = vpow.pop %v192
    %v194 = vmul.f32 %v191, 1.442695
    %v195 = vpow.pop %v194
    %196 = vmatpush.xpose.msra.mxu0 0.0
    %197 = vmatpush.xpose.msra.mxu0 0.0
    %198 = vmatpush.xpose.msra.mxu0 0.0
    %199 = vmatpush.xpose.msra.mxu0 0.0
    %200 = vmatpush.xpose.msra.mxu0 0.0
    %201 = vmatpush.xpose.msra.mxu0 0.0
    %202 = vmatpush.xpose.msra.mxu0 0.0
    %203 = vmatpush.xpose.msra.mxu0 0.0
    %204 = vmatpush.xpose.msra.mxu0 0.0
    %205 = vmatpush.xpose.msra.mxu0 0.0
    %206 = vmatpush.xpose.msra.mxu0 0.0
    %207 = vmatpush.xpose.msra.mxu0 0.0
    %208 = vmatpush.xpose.msra.mxu0 0.0
    %209 = vmatpush.xpose.msra.mxu0 0.0
    %210 = vmatpush.xpose.msra.mxu0 0.0
    %211 = vmatpush.xpose.msra.mxu0 %v137
    %212 = vmatmul.f32.gmra.mxu0 %v137
    %v213 = vpop.f32.mrf.mxu0
    %v214 = vadd.f32 0.0, %v213
    %215 = vdwg.mxu0
    %v216 = vmul.f32 %v214, 14.285714
    %v217 = vmul.f32 %v216, 1.442695
    %v218 = vpow.pop %v217
    %v219 = vld [vmem:[%s2] sm:$0xff]
    %v220 = vld [vmem:[%s2 + $0x8] sm:$0xff]
    %v221 = vld [vmem:[%s3] sm:$0xff]
    %v222 = vld [vmem:[%s3 + $0x8] sm:$0xff]
    %v223 = vld [vmem:[%s4] sm:$0xff]
    %v224 = vld [vmem:[%s4 + $0x8] sm:$0xff]
    %v225 = vld [vmem:[%s5] sm:$0xff]
    %v226 = vld [vmem:[%s6] sm:$0xff]
    %v227 = vmul.f32 %v164, %v219
    %v228 = vmul.f32 %v166, %v220
    %vm229 = vcmask 64512
    %v230 = vsel %vm229, %v227, 0.0
    %231 = vadd.xlane.f32.xlu0 %v230
    %v232 = vpop.xlane.xlu0 %231
    %v233 = vsel %vm229, %v228, 0.0
    %234 = vadd.xlane.f32.xlu0 %v233
    %v235 = vpop.xlane.xlu0 %234
    %v236 = vsel %vm229, %v164, 0.0
    %237 = vadd.xlane.f32.xlu0 %v236
    %v238 = vpop.xlane.xlu0 %237
    %v239 = vsel %vm229, %v166, 0.0
    %240 = vadd.xlane.f32.xlu0 %v239
    %v241 = vpop.xlane.xlu0 %240
    %v242 = vsel %vm229, %v219, 0.0
    %243 = vadd.xlane.f32.xlu0 %v242
    %v244 = vpop.xlane.xlu0 %243
    %v245 = vsel %vm229, %v220, 0.0
    %246 = vadd.xlane.f32.xlu0 %v245
    %v247 = vpop.xlane.xlu0 %246
    %v248 = vsub.f32 %v238, %v232
    %v249 = vsub.f32 %v241, %v235
    %v250 = vld [vmem:[%s7] sm:$0xff]
    %v251 = vld [vmem:[%s7 + $0x8] sm:$0xff]
    %v252 = vadd.f32 %v232, 1e-08
    %v253 = vadd.f32 %v235, 1e-08
    %v254 = vadd.f32 %v232, %v248
    %v255 = vadd.f32 %v235, %v249
    %v256 = vadd.f32 %v254, 1e-08
    %v257 = vadd.f32 %v255, 1e-08
    %v258 = vrcp.pop %v256
    %v259 = vmul.f32 %v256, %v258
    %v260 = vsub.f32 1.0, %v259
    %v261 = vmul.f32 %v258, %v260
    %v262 = vadd.f32 %v258, %v261
    %vm263 = vweird.f32 %v256
    %vm264 = vweird.f32 %v258
    %vm265 = vmor %vm263, %vm264
    %v266 = vsel %vm265, %v258, %v262
    %v267 = vand.u32 2147483647, %v256
    %vm268 = vcmp.eq.f32.partialorder %v267, 8.507059e+37
    %v269 = vand.u32 %v256, 2147483648
    %v270 = vor.u32 1.1754944e-38, %v269
    %v271 = vsel %vm268, %v270, %v266
    %v272 = vmul.f32 %v252, %v271
    %v273 = vrcp.pop %v257
    %v274 = vmul.f32 %v257, %v273
    %v275 = vsub.f32 1.0, %v274
    %v276 = vmul.f32 %v273, %v275
    %v277 = vadd.f32 %v273, %v276
    %vm278 = vweird.f32 %v257
    %vm279 = vweird.f32 %v273
    %vm280 = vmor %vm278, %vm279
    %v281 = vsel %vm280, %v273, %v277
    %v282 = vand.u32 2147483647, %v257
    %vm283 = vcmp.eq.f32.partialorder %v282, 8.507059e+37
    %v284 = vand.u32 %v257, 2147483648
    %v285 = vor.u32 1.1754944e-38, %v284
    %v286 = vsel %vm283, %v285, %v281
    %v287 = vmul.f32 %v253, %v286
    %v288 = vlog2.pop %v272
    %v289 = vmul.f32 %v288, 0.6931472
    %v290 = vlog2.pop %v287
    %v291 = vmul.f32 %v290, 0.6931472
    %v292 = vmax.f32 %v244, 1e-30
    %v293 = vmax.f32 %v247, 1e-30
    %v294 = vrcp.pop %v292
    %v295 = vmul.f32 %v292, %v294
    %v296 = vsub.f32 1.0, %v295
    %v297 = vmul.f32 %v294, %v296
    %v298 = vadd.f32 %v294, %v297
    %vm299 = vweird.f32 %v292
    %vm300 = vweird.f32 %v294
    %vm301 = vmor %vm299, %vm300
    %v302 = vsel %vm301, %v294, %v298
    %v303 = vand.u32 2147483647, %v292
    %vm304 = vcmp.eq.f32.partialorder %v303, 8.507059e+37
    %v305 = vand.u32 %v292, 2147483648
    %v306 = vor.u32 1.1754944e-38, %v305
    %v307 = vsel %vm304, %v306, %v302
    %v308 = vmul.f32 %v289, %v307
    %v309 = vrcp.pop %v293
    %v310 = vmul.f32 %v293, %v309
    %v311 = vsub.f32 1.0, %v310
    %v312 = vmul.f32 %v309, %v311
    %v313 = vadd.f32 %v309, %v312
    %vm314 = vweird.f32 %v293
    %vm315 = vweird.f32 %v309
    %vm316 = vmor %vm314, %vm315
    %v317 = vsel %vm316, %v309, %v313
    %v318 = vand.u32 2147483647, %v293
    %vm319 = vcmp.eq.f32.partialorder %v318, 8.507059e+37
    %v320 = vand.u32 %v293, 2147483648
    %v321 = vor.u32 1.1754944e-38, %v320
    %v322 = vsel %vm319, %v321, %v317
    %v323 = vmul.f32 %v291, %v322
    %vm324 = vcmp.gt.f32.partialorder %v250, 0.0
    %vm325 = vcmp.gt.f32.partialorder %v251, 0.0
    %v326 = vsel %vm324, %v308, 0.0
    %v327 = vsel %vm325, %v323, 0.0
    %vm328 = vcmask 7168
    %v329 = vsel %vm328, %v250, 0.0
    %v330 = vsel %vm328, %v251, 0.0
    %v331 = vadd.f32 %v329, %v330
    %332 = vadd.xlane.f32.xlu0 %v331
    %v333 = vpop.xlane.xlu0 %332
    %v334 = vrot.slane %v333, 4
    %v335 = vadd.f32 %v333, %v334
    %v336 = vrot.slane %v335, 2
    %v337 = vadd.f32 %v335, %v336
    %v338 = vrot.slane %v337, 1
    %v339 = vadd.f32 %v337, %v338
    %s340 = vtos %v339
    %v341 = vsel %vm328, %v326, 0.0
    %v342 = vsel %vm328, %v327, 0.0
    %v343 = vadd.f32 %v341, %v342
    %344 = vadd.xlane.f32.xlu0 %v343
    %v345 = vpop.xlane.xlu0 %344
    %v346 = vrot.slane %v345, 4
    %v347 = vadd.f32 %v345, %v346
    %v348 = vrot.slane %v347, 2
    %v349 = vadd.f32 %v347, %v348
    %v350 = vrot.slane %v349, 1
    %v351 = vadd.f32 %v349, %v350
    %s352 = vtos %v351
    %s353 = smax.f32 %s340, 1.0
    %v354 = vstv %s353
    %v355 = vrcp.pop %v354
    %v356 = vmul.f32 %v354, %v355
    %v357 = vsub.f32 1.0, %v356
    %v358 = vmul.f32 %v355, %v357
    %v359 = vadd.f32 %v355, %v358
    %vm360 = vweird.f32 %v354
    %vm361 = vweird.f32 %v355
    %vm362 = vmor %vm360, %vm361
    %v363 = vsel %vm362, %v355, %v359
    %v364 = vand.u32 2147483647, %v354
    %vm365 = vcmp.eq.f32.partialorder %v364, 8.507059e+37
    %v366 = vand.u32 %v354, 2147483648
    %v367 = vor.u32 1.1754944e-38, %v366
    %v368 = vsel %vm365, %v367, %v363
    %s369 = vtos %v368
    %s370 = smul.f32 %s352, %s369
    %s371 = ssub.f32 0.0, %s370
    %p372 = scmp.gt.f32.partialorder %s340, 0.0
    %s373 = scalar_select %p372, %s371, 0.0
    %p374 = scmp.eq.f32.partialorder %s373, %s373
    %s375 = sand.u32 2147483647, %s373
    %p376 = scmp.lt.f32.partialorder %s375, 3e+38
    %p377 = pnand %p374, %p376
    %p378 = pneg %p377
    %s379 = scalar_select %p378, %s373, 0.0
    %v380 = vadd.f32 %v230, %v233
    %v381 = vrot.slane %v380, 4
    %v382 = vadd.f32 %v380, %v381
    %v383 = vrot.slane %v382, 2
    %v384 = vadd.f32 %v382, %v383
    %v385 = vrot.slane %v384, 1
    %v386 = vadd.f32 %v384, %v385
    %v387 = vadd.f32 %v236, %v239
    %v388 = vrot.slane %v387, 4
    %v389 = vadd.f32 %v387, %v388
    %v390 = vrot.slane %v389, 2
    %v391 = vadd.f32 %v389, %v390
    %v392 = vrot.slane %v391, 1
    %v393 = vadd.f32 %v391, %v392
    %v394 = vadd.f32 %v242, %v245
    %v395 = vrot.slane %v394, 4
    %v396 = vadd.f32 %v394, %v395
    %v397 = vrot.slane %v396, 2
    %v398 = vadd.f32 %v396, %v397
    %v399 = vrot.slane %v398, 1
    %v400 = vadd.f32 %v398, %v399
    %v401 = vsub.f32 %v393, %v386
    %v402 = vld [vmem:[%s8] sm:$0x1]
    %v403 = vadd.f32 %v386, 1e-08
    %v404 = vadd.f32 %v386, %v401
    %v405 = vadd.f32 %v404, 1e-08
    %v406 = vrcp.pop %v405
    %v407 = vmul.f32 %v405, %v406
    %v408 = vsub.f32 1.0, %v407
    %v409 = vmul.f32 %v406, %v408
    %v410 = vadd.f32 %v406, %v409
    %vm411 = vweird.f32 %v405
    %vm412 = vweird.f32 %v406
    %vm413 = vmor %vm411, %vm412
    %v414 = vsel %vm413, %v406, %v410
    %v415 = vand.u32 2147483647, %v405
    %vm416 = vcmp.eq.f32.partialorder %v415, 8.507059e+37
    %v417 = vand.u32 %v405, 2147483648
    %v418 = vor.u32 1.1754944e-38, %v417
    %v419 = vsel %vm416, %v418, %v414
    %v420 = vmul.f32 %v403, %v419
    %v421 = vlog2.pop %v420
    %v422 = vmul.f32 %v421, 0.6931472
    %v423 = vmax.f32 %v400, 1e-30
    %v424 = vrcp.pop %v423
    %v425 = vmul.f32 %v423, %v424
    %v426 = vsub.f32 1.0, %v425
    %v427 = vmul.f32 %v424, %v426
    %v428 = vadd.f32 %v424, %v427
    %vm429 = vweird.f32 %v423
    %vm430 = vweird.f32 %v424
    %vm431 = vmor %vm429, %vm430
    %v432 = vsel %vm431, %v424, %v428
    %v433 = vand.u32 2147483647, %v423
    %vm434 = vcmp.eq.f32.partialorder %v433, 8.507059e+37
    %v435 = vand.u32 %v423, 2147483648
    %v436 = vor.u32 1.1754944e-38, %v435
    %v437 = vsel %vm434, %v436, %v432
    %v438 = vmul.f32 %v422, %v437
    %vm439 = vcmp.gt.f32.partialorder %v402, 0.0
    %v440 = vsel %vm439, %v438, 0.0
    %vm441 = vcmask 57344
    %v442 = vsel %vm441, %v402, 0.0
    %443 = vadd.xlane.f32.xlu0 %v442
    %v444 = vpop.xlane.xlu0 %443
    %v445 = vrot.slane %v444, 4
    %v446 = vadd.f32 %v444, %v445
    %v447 = vrot.slane %v446, 2
    %v448 = vadd.f32 %v446, %v447
    %v449 = vrot.slane %v448, 1
    %v450 = vadd.f32 %v448, %v449
    %s451 = vtos %v450
    %v452 = vsel %vm441, %v440, 0.0
    %453 = vadd.xlane.f32.xlu0 %v452
    %v454 = vpop.xlane.xlu0 %453
    %v455 = vrot.slane %v454, 4
    %v456 = vadd.f32 %v454, %v455
    %v457 = vrot.slane %v456, 2
    %v458 = vadd.f32 %v456, %v457
    %v459 = vrot.slane %v458, 1
    %v460 = vadd.f32 %v458, %v459
    %s461 = vtos %v460
    %s462 = smax.f32 %s451, 1.0
    %v463 = vstv %s462
    %v464 = vrcp.pop %v463
    %v465 = vmul.f32 %v463, %v464
    %v466 = vsub.f32 1.0, %v465
    %v467 = vmul.f32 %v464, %v466
    %v468 = vadd.f32 %v464, %v467
    %vm469 = vweird.f32 %v463
    %vm470 = vweird.f32 %v464
    %vm471 = vmor %vm469, %vm470
    %v472 = vsel %vm471, %v464, %v468
    %v473 = vand.u32 2147483647, %v463
    %vm474 = vcmp.eq.f32.partialorder %v473, 8.507059e+37
    %v475 = vand.u32 %v463, 2147483648
    %v476 = vor.u32 1.1754944e-38, %v475
    %v477 = vsel %vm474, %v476, %v472
    %s478 = vtos %v477
    %s479 = smul.f32 %s461, %s478
    %s480 = ssub.f32 0.0, %s479
    %p481 = scmp.gt.f32.partialorder %s451, 0.0
    %s482 = scalar_select %p481, %s480, 0.0
    %p483 = scmp.eq.f32.partialorder %s482, %s482
    %s484 = sand.u32 2147483647, %s482
    %p485 = scmp.lt.f32.partialorder %s484, 3e+38
    %p486 = pnand %p483, %p485
    %p487 = pneg %p486
    %s488 = scalar_select %p487, %s482, 0.0
    %v489 = vmul.f32 %v193, %v221
    %v490 = vmul.f32 %v195, %v222
    %vm491 = vcmask 130048
    %v492 = vsel %vm491, %v489, 0.0
    %493 = vadd.xlane.f32.xlu0 %v492
    %v494 = vpop.xlane.xlu0 %493
    %v495 = vsel %vm491, %v490, 0.0
    %496 = vadd.xlane.f32.xlu0 %v495
    %v497 = vpop.xlane.xlu0 %496
    %v498 = vmul.f32 %v193, %v223
    %v499 = vmul.f32 %v195, %v224
    %v500 = vsel %vm491, %v498, 0.0
    %501 = vadd.xlane.f32.xlu0 %v500
    %v502 = vpop.xlane.xlu0 %501
    %v503 = vsel %vm491, %v499, 0.0
    %504 = vadd.xlane.f32.xlu0 %v503
    %v505 = vpop.xlane.xlu0 %504
    %v506 = vsel %vm491, %v221, 0.0
    %507 = vadd.xlane.f32.xlu0 %v506
    %v508 = vpop.xlane.xlu0 %507
    %v509 = vsel %vm491, %v222, 0.0
    %510 = vadd.xlane.f32.xlu0 %v509
    %v511 = vpop.xlane.xlu0 %510
    %v512 = vld [vmem:[%s9] sm:$0xff]
    %v513 = vld [vmem:[%s9 + $0x8] sm:$0xff]
    %v514 = vadd.f32 %v494, 1e-08
    %v515 = vadd.f32 %v497, 1e-08
    %v516 = vadd.f32 %v494, %v502
    %v517 = vadd.f32 %v497, %v505
    %v518 = vadd.f32 %v516, 1e-08
    %v519 = vadd.f32 %v517, 1e-08
    %v520 = vrcp.pop %v518
    %v521 = vmul.f32 %v518, %v520
    %v522 = vsub.f32 1.0, %v521
    %v523 = vmul.f32 %v520, %v522
    %v524 = vadd.f32 %v520, %v523
    %vm525 = vweird.f32 %v518
    %vm526 = vweird.f32 %v520
    %vm527 = vmor %vm525, %vm526
    %v528 = vsel %vm527, %v520, %v524
    %v529 = vand.u32 2147483647, %v518
    %vm530 = vcmp.eq.f32.partialorder %v529, 8.507059e+37
    %v531 = vand.u32 %v518, 2147483648
    %v532 = vor.u32 1.1754944e-38, %v531
    %v533 = vsel %vm530, %v532, %v528
    %v534 = vmul.f32 %v514, %v533
    %v535 = vrcp.pop %v519
    %v536 = vmul.f32 %v519, %v535
    %v537 = vsub.f32 1.0, %v536
    %v538 = vmul.f32 %v535, %v537
    %v539 = vadd.f32 %v535, %v538
    %vm540 = vweird.f32 %v519
    %vm541 = vweird.f32 %v535
    %vm542 = vmor %vm540, %vm541
    %v543 = vsel %vm542, %v535, %v539
    %v544 = vand.u32 2147483647, %v519
    %vm545 = vcmp.eq.f32.partialorder %v544, 8.507059e+37
    %v546 = vand.u32 %v519, 2147483648
    %v547 = vor.u32 1.1754944e-38, %v546
    %v548 = vsel %vm545, %v547, %v543
    %v549 = vmul.f32 %v515, %v548
    %v550 = vlog2.pop %v534
    %v551 = vmul.f32 %v550, 0.6931472
    %v552 = vlog2.pop %v549
    %v553 = vmul.f32 %v552, 0.6931472
    %v554 = vmax.f32 %v508, 1e-30
    %v555 = vmax.f32 %v511, 1e-30
    %v556 = vrcp.pop %v554
    %v557 = vmul.f32 %v554, %v556
    %v558 = vsub.f32 1.0, %v557
    %v559 = vmul.f32 %v556, %v558
    %v560 = vadd.f32 %v556, %v559
    %vm561 = vweird.f32 %v554
    %vm562 = vweird.f32 %v556
    %vm563 = vmor %vm561, %vm562
    %v564 = vsel %vm563, %v556, %v560
    %v565 = vand.u32 2147483647, %v554
    %vm566 = vcmp.eq.f32.partialorder %v565, 8.507059e+37
    %v567 = vand.u32 %v554, 2147483648
    %v568 = vor.u32 1.1754944e-38, %v567
    %v569 = vsel %vm566, %v568, %v564
    %v570 = vmul.f32 %v551, %v569
    %v571 = vrcp.pop %v555
    %v572 = vmul.f32 %v555, %v571
    %v573 = vsub.f32 1.0, %v572
    %v574 = vmul.f32 %v571, %v573
    %v575 = vadd.f32 %v571, %v574
    %vm576 = vweird.f32 %v555
    %vm577 = vweird.f32 %v571
    %vm578 = vmor %vm576, %vm577
    %v579 = vsel %vm578, %v571, %v575
    %v580 = vand.u32 2147483647, %v555
    %vm581 = vcmp.eq.f32.partialorder %v580, 8.507059e+37
    %v582 = vand.u32 %v555, 2147483648
    %v583 = vor.u32 1.1754944e-38, %v582
    %v584 = vsel %vm581, %v583, %v579
    %v585 = vmul.f32 %v553, %v584
    %vm586 = vcmp.gt.f32.partialorder %v512, 0.0
    %vm587 = vcmp.gt.f32.partialorder %v513, 0.0
    %v588 = vsel %vm586, %v570, 0.0
    %v589 = vsel %vm587, %v585, 0.0
    %v590 = vsel %vm328, %v512, 0.0
    %v591 = vsel %vm328, %v513, 0.0
    %v592 = vadd.f32 %v590, %v591
    %593 = vadd.xlane.f32.xlu0 %v592
    %v594 = vpop.xlane.xlu0 %593
    %v595 = vrot.slane %v594, 4
    %v596 = vadd.f32 %v594, %v595
    %v597 = vrot.slane %v596, 2
    %v598 = vadd.f32 %v596, %v597
    %v599 = vrot.slane %v598, 1
    %v600 = vadd.f32 %v598, %v599
    %s601 = vtos %v600
    %v602 = vsel %vm328, %v588, 0.0
    %v603 = vsel %vm328, %v589, 0.0
    %v604 = vadd.f32 %v602, %v603
    %605 = vadd.xlane.f32.xlu0 %v604
    %v606 = vpop.xlane.xlu0 %605
    %v607 = vrot.slane %v606, 4
    %v608 = vadd.f32 %v606, %v607
    %v609 = vrot.slane %v608, 2
    %v610 = vadd.f32 %v608, %v609
    %v611 = vrot.slane %v610, 1
    %v612 = vadd.f32 %v610, %v611
    %s613 = vtos %v612
    %s614 = smax.f32 %s601, 1.0
    %v615 = vstv %s614
    %v616 = vrcp.pop %v615
    %v617 = vmul.f32 %v615, %v616
    %v618 = vsub.f32 1.0, %v617
    %v619 = vmul.f32 %v616, %v618
    %v620 = vadd.f32 %v616, %v619
    %vm621 = vweird.f32 %v615
    %vm622 = vweird.f32 %v616
    %vm623 = vmor %vm621, %vm622
    %v624 = vsel %vm623, %v616, %v620
    %v625 = vand.u32 2147483647, %v615
    %vm626 = vcmp.eq.f32.partialorder %v625, 8.507059e+37
    %v627 = vand.u32 %v615, 2147483648
    %v628 = vor.u32 1.1754944e-38, %v627
    %v629 = vsel %vm626, %v628, %v624
    %s630 = vtos %v629
    %s631 = smul.f32 %s613, %s630
    %s632 = ssub.f32 0.0, %s631
    %p633 = scmp.gt.f32.partialorder %s601, 0.0
    %s634 = scalar_select %p633, %s632, 0.0
    %p635 = scmp.eq.f32.partialorder %s634, %s634
    %s636 = sand.u32 2147483647, %s634
    %p637 = scmp.lt.f32.partialorder %s636, 3e+38
    %p638 = pnand %p635, %p637
    %p639 = pneg %p638
    %s640 = scalar_select %p639, %s634, 0.0
    %v641 = vmul.f32 %v218, %v225
    %v642 = vsel %vm229, %v641, 0.0
    %643 = vadd.xlane.f32.xlu0 %v642
    %v644 = vpop.xlane.xlu0 %643
    %v645 = vmul.f32 %v218, %v226
    %v646 = vsel %vm229, %v645, 0.0
    %647 = vadd.xlane.f32.xlu0 %v646
    %v648 = vpop.xlane.xlu0 %647
    %v649 = vsel %vm229, %v225, 0.0
    %650 = vadd.xlane.f32.xlu0 %v649
    %v651 = vpop.xlane.xlu0 %650
    %v652 = vld [vmem:[%s10] sm:$0xff]
    %v653 = vadd.f32 %v644, 1e-08
    %v654 = vadd.f32 %v644, %v648
    %v655 = vadd.f32 %v654, 1e-08
    %v656 = vrcp.pop %v655
    %v657 = vmul.f32 %v655, %v656
    %v658 = vsub.f32 1.0, %v657
    %v659 = vmul.f32 %v656, %v658
    %v660 = vadd.f32 %v656, %v659
    %vm661 = vweird.f32 %v655
    %vm662 = vweird.f32 %v656
    %vm663 = vmor %vm661, %vm662
    %v664 = vsel %vm663, %v656, %v660
    %v665 = vand.u32 2147483647, %v655
    %vm666 = vcmp.eq.f32.partialorder %v665, 8.507059e+37
    %v667 = vand.u32 %v655, 2147483648
    %v668 = vor.u32 1.1754944e-38, %v667
    %v669 = vsel %vm666, %v668, %v664
    %v670 = vmul.f32 %v653, %v669
    %v671 = vlog2.pop %v670
    %v672 = vmul.f32 %v671, 0.6931472
    %v673 = vmax.f32 %v651, 1e-30
    %v674 = vrcp.pop %v673
    %v675 = vmul.f32 %v673, %v674
    %v676 = vsub.f32 1.0, %v675
    %v677 = vmul.f32 %v674, %v676
    %v678 = vadd.f32 %v674, %v677
    %vm679 = vweird.f32 %v673
    %vm680 = vweird.f32 %v674
    %vm681 = vmor %vm679, %vm680
    %v682 = vsel %vm681, %v674, %v678
    %v683 = vand.u32 2147483647, %v673
    %vm684 = vcmp.eq.f32.partialorder %v683, 8.507059e+37
    %v685 = vand.u32 %v673, 2147483648
    %v686 = vor.u32 1.1754944e-38, %v685
    %v687 = vsel %vm684, %v686, %v682
    %v688 = vmul.f32 %v672, %v687
    %vm689 = vcmp.gt.f32.partialorder %v652, 0.0
    %v690 = vsel %vm689, %v688, 0.0
    %v691 = vsel %vm328, %v652, 0.0
    %692 = vadd.xlane.f32.xlu0 %v691
    %v693 = vpop.xlane.xlu0 %692
    %v694 = vrot.slane %v693, 4
    %v695 = vadd.f32 %v693, %v694
    %v696 = vrot.slane %v695, 2
    %v697 = vadd.f32 %v695, %v696
    %v698 = vrot.slane %v697, 1
    %v699 = vadd.f32 %v697, %v698
    %s700 = vtos %v699
    %v701 = vsel %vm328, %v690, 0.0
    %702 = vadd.xlane.f32.xlu0 %v701
    %v703 = vpop.xlane.xlu0 %702
    %v704 = vrot.slane %v703, 4
    %v705 = vadd.f32 %v703, %v704
    %v706 = vrot.slane %v705, 2
    %v707 = vadd.f32 %v705, %v706
    %v708 = vrot.slane %v707, 1
    %v709 = vadd.f32 %v707, %v708
    %s710 = vtos %v709
    %s711 = smax.f32 %s700, 1.0
    %v712 = vstv %s711
    %v713 = vrcp.pop %v712
    %v714 = vmul.f32 %v712, %v713
    %v715 = vsub.f32 1.0, %v714
    %v716 = vmul.f32 %v713, %v715
    %v717 = vadd.f32 %v713, %v716
    %vm718 = vweird.f32 %v712
    %vm719 = vweird.f32 %v713
    %vm720 = vmor %vm718, %vm719
    %v721 = vsel %vm720, %v713, %v717
    %v722 = vand.u32 2147483647, %v712
    %vm723 = vcmp.eq.f32.partialorder %v722, 8.507059e+37
    %v724 = vand.u32 %v712, 2147483648
    %v725 = vor.u32 1.1754944e-38, %v724
    %v726 = vsel %vm723, %v725, %v721
    %s727 = vtos %v726
    %s728 = smul.f32 %s710, %s727
    %s729 = ssub.f32 0.0, %s728
    %p730 = scmp.gt.f32.partialorder %s700, 0.0
    %s731 = scalar_select %p730, %s729, 0.0
    %p732 = scmp.eq.f32.partialorder %s731, %s731
    %s733 = sand.u32 2147483647, %s731
    %p734 = scmp.lt.f32.partialorder %s733, 3e+38
    %p735 = pnand %p732, %p734
    %p736 = pneg %p735
    %s737 = scalar_select %p736, %s731, 0.0
    %s738 = sadd.f32 %s379, %s488
    %s739 = sadd.f32 %s738, %s640
    %s740 = sadd.f32 %s739, %s737
    %s741 = scalar_lea.smem [#allocation2], 0
    %742 = sst [smem:[%s741]] %s740
    // Predicated region
    $region46: #{tpu_custom_call.1} parent=1 // pred_check
      _
    $region47: #{tpu_custom_call.1} parent=1 // pred_check_branch
      %744 = sbr.rel (0) target = $region49
    $region48: #{tpu_custom_call.1} parent=1 // pred_region
      %746 = vsyncadd [#allocation3], 0
      %s748 = sshll.u32 %s11, 4
      %s749 = int_to_ptr.hbm [resolvable:$true] %s748
      %751 = dma.smem_to_hbm [#allocation2], 16, %s749, [#allocation3]
    $region49: #{tpu_custom_call.1} parent=1 // pred_fallthru
      _
    // Predicated region
    $region50: #{tpu_custom_call.1} parent=1 // pred_check
      _
    $region51: #{tpu_custom_call.1} parent=1 // pred_check_branch
      %753 = sbr.rel (0) target = $region53
    $region52: #{tpu_custom_call.1} parent=1 // pred_region
      %755 = dma.done [#allocation3], 16
    $region53: #{tpu_custom_call.1} parent=1 // pred_fallthru
      _
    %756 = sfence
    %757 = vsyncpa [#allocation3], 1

</llo_original>
